<compile_context>
chip_gen: v7x
topology: tpu7x:2x2x1
jax: 0.10.0
libtpu: 0.0.40
codegen_flags: <defaults>
</compile_context>

<pallas_src>
import functools
import math

import jax
import jax.numpy as jnp
from jax.experimental import pallas as pl
from jax.experimental.pallas import tpu as pltpu


# ----------------------------- fused FFN kernel -----------------------------

def _ffn_kernel(x_ref, w1_ref, b1_ref, w2_ref, b2_ref, o_ref, acc_ref):
    """Grid step (i, j): row tile i (parallel), d_ff tile j (reduction, last axis)."""
    j = pl.program_id(1)

    @pl.when(j == 0)
    def _init():
        acc_ref[...] = jnp.zeros_like(acc_ref)

    # h = GELU(x_tile @ W1_tile + b1_tile)                     [tm, tf] in f32
    # bf16 MXU operands (w1_ref already bf16), f32 accumulation.
    h = jnp.dot(x_ref[...].astype(jnp.bfloat16), w1_ref[...],
                preferred_element_type=jnp.float32)
    h = h + b1_ref[...]
    # exact (erf-based) GELU — matches torch.nn.GELU() default (approximate='none')
    h = 0.5 * h * (1.0 + jax.lax.erf(h * (1.0 / math.sqrt(2.0))))

    # accumulate the second matmul over d_ff tiles               [tm, d_model] f32
    acc_ref[...] += jnp.dot(h.astype(jnp.bfloat16), w2_ref[...],
                            preferred_element_type=jnp.float32)

    @pl.when(j == pl.num_programs(1) - 1)
    def _finalize():
        o_ref[...] = (acc_ref[...] + b2_ref[...]).astype(o_ref.dtype)


# ----------------------------- wrapper helpers --------------------------------

def _round_up(a, b):
    return (a + b - 1) // b * b


def _pick_tile(dim, preferred, align):
    """Largest multiple of `align` <= `preferred` that divides `dim`, else full dim."""
    if dim <= preferred:
        return dim
    t = (preferred // align) * align
    while t >= align:
        if dim % t == 0:
            return t
        t -= align
    return dim  # fall back to the full (untiled) dimension


def _vmem_limit_bytes():
    """Explicit scoped-VMEM limit: ~100 MiB on v5e/v6e, ~52 MiB on v7x."""
    default_cap = 64 << 20  # conservative fallback = v7x per-TC VMEM
    try:
        info = pltpu.get_tpu_info()
        cap = int(getattr(info, "vmem_capacity_bytes", default_cap))
    except Exception:  # query unavailable (e.g. CPU interpret) -> be conservative
        cap = default_cap
    return int(min(cap - (12 << 20), 100 << 20))


def _vmem_estimate(tm, tf, d_model, act_bytes):
    """Rough per-step VMEM usage: double-buffered I/O tiles + f32 accumulator."""
    return (2 * tm * d_model * act_bytes          # x tile (double-buffered)
            + 2 * d_model * tf * 2                # W1 tile, bf16
            + 2 * tf * 4                          # b1 tile, f32
            + 2 * tf * d_model * 2                # W2 tile, bf16
            + 2 * d_model * 4                     # b2, f32
            + 2 * tm * d_model * act_bytes        # out tile (double-buffered)
            + tm * d_model * 4)                   # f32 accumulator scratch


# ----------------------------- public entry point -----------------------------

def feed_forward(x, w1, b1, w2, b2, *, tile_m=512, tile_f=512):
    """y = GELU(x @ w1 + b1) @ w2 + b2, fused in a single pallas_call."""
    orig_shape = x.shape
    d_model = orig_shape[-1]
    d_ff = w1.shape[1]
    x2d = x.reshape(-1, d_model)
    m = x2d.shape[0]
    act_bytes = jnp.dtype(x.dtype).itemsize

    # --- tile selection -------------------------------------------------------
    tm = _round_up(min(tile_m, _round_up(m, 8)), 8)   # sublane-aligned row tile
    tf = _pick_tile(d_ff, tile_f, 128)                # lane-aligned d_ff tile

    vmem_limit = _vmem_limit_bytes()
    budget = max(vmem_limit - (8 << 20), 8 << 20)     # headroom for internal scratch
    while _vmem_estimate(tm, tf, d_model, act_bytes) > budget and tm > 8:
        tm = max(8, _round_up(tm // 2, 8))
    while _vmem_estimate(tm, tf, d_model, act_bytes) > budget and tf > 128:
        new_tf = _pick_tile(d_ff, max(128, tf // 2), 128)
        if new_tf == tf:
            break
        tf = new_tf

    # --- explicit row padding (no full-M fallback tile) ------------------------
    m_pad = _round_up(m, tm)
    if m_pad != m:
        x2d = jnp.pad(x2d, ((0, m_pad - m), (0, 0)))

    # --- operand prep: bf16 weights for the MXU, f32 biases --------------------
    w1_bf = w1.astype(jnp.bfloat16)
    w2_bf = w2.astype(jnp.bfloat16)
    b1r = b1.astype(jnp.float32).reshape(1, d_ff)
    b2r = b2.astype(jnp.float32).reshape(1, d_model)

    cost = pl.CostEstimate(
        flops=4 * m_pad * d_model * d_ff,             # two matmuls
        transcendentals=m_pad * d_ff,                 # one erf per hidden element
        bytes_accessed=(m_pad * d_model * act_bytes   # x
                        + d_model * d_ff * 2          # W1 (bf16)
                        + d_ff * d_model * 2          # W2 (bf16)
                        + d_ff * 4 + d_model * 4      # biases
                        + m_pad * d_model * act_bytes))  # out

    out = pl.pallas_call(
        _ffn_kernel,
        out_shape=jax.ShapeDtypeStruct((m_pad, d_model), x.dtype),
        grid_spec=pltpu.PrefetchScalarGridSpec(
            num_scalar_prefetch=0,
            grid=(m_pad // tm, d_ff // tf),
            in_specs=[
                pl.BlockSpec((tm, d_model), lambda i, j: (i, 0)),   # x row tile
                pl.BlockSpec((d_model, tf), lambda i, j: (0, j)),   # W1 column tile
                pl.BlockSpec((1, tf),       lambda i, j: (0, j)),   # b1 tile
                pl.BlockSpec((tf, d_model), lambda i, j: (j, 0)),   # W2 row tile
                pl.BlockSpec((1, d_model),  lambda i, j: (0, 0)),   # b2 (resident)
            ],
            out_specs=pl.BlockSpec((tm, d_model), lambda i, j: (i, 0)),
            scratch_shapes=[pltpu.VMEM((tm, d_model), jnp.float32)],
        ),
        compiler_params=pltpu.CompilerParams(
            dimension_semantics=("parallel", "arbitrary"),
            vmem_limit_bytes=vmem_limit,
        ),
        cost_estimate=cost,
    )(x2d, w1_bf, b1r, w2_bf, b2r)

    if m_pad != m:
        out = out[:m]
    return out.reshape(orig_shape)


# ----------------------------- main ------------------------------------------

if __name__ == "__main__":
    B, T = 2, 64
    D_MODEL, D_FF = 128, 512

    key = jax.random.PRNGKey(0)
    k_x, k_w1, k_b1, k_w2, k_b2 = jax.random.split(key, 5)

    x = jax.random.normal(k_x, (B, T, D_MODEL), jnp.float32)
    w1 = jax.random.normal(k_w1, (D_MODEL, D_FF), jnp.float32) / math.sqrt(D_MODEL)
    b1 = 0.1 * jax.random.normal(k_b1, (D_FF,), jnp.float32)
    w2 = jax.random.normal(k_w2, (D_FF, D_MODEL), jnp.float32) / math.sqrt(D_FF)
    b2 = 0.1 * jax.random.normal(k_b2, (D_MODEL,), jnp.float32)

    # Small tiles here only so the test shape exercises a 2x2 grid (row tiling +
    # d_ff reduction accumulator). Production defaults are tile_m=512, tile_f=512.
    fwd = jax.jit(functools.partial(feed_forward, tile_m=64, tile_f=256))
    out = jax.block_until_ready(fwd(x, w1, b1, w2, b2))

    assert out.shape == (B, T, D_MODEL) and out.dtype == jnp.float32
    assert bool(jnp.all(jnp.isfinite(out)))

    hp = jax.lax.Precision.HIGHEST

    # Reference matched to the kernel's numerics (bf16 MXU operands, f32 accumulate).
    xb = x.astype(jnp.bfloat16).astype(jnp.float32)
    w1b = w1.astype(jnp.bfloat16).astype(jnp.float32)
    w2b = w2.astype(jnp.bfloat16).astype(jnp.float32)
    h_ref = jax.nn.gelu(jnp.matmul(xb, w1b, precision=hp) + b1, approximate=False)
    hb = h_ref.astype(jnp.bfloat16).astype(jnp.float32)
    ref_bf16 = jnp.matmul(hb, w2b, precision=hp) + b2
    err_bf16 = float(jnp.max(jnp.abs(out - ref_bf16)))
    assert bool(jnp.allclose(out, ref_bf16, atol=5e-3, rtol=5e-3)), \
        f"max abs err vs bf16-matched ref {err_bf16}"

    # Pure-f32 reference (exact GELU, dropout = identity): loose tolerance due to the
    # intentional bf16 MXU-operand path.
    ref = jnp.matmul(
        jax.nn.gelu(jnp.matmul(x, w1, precision=hp) + b1, approximate=False),
        w2, precision=hp) + b2
    err = float(jnp.max(jnp.abs(out - ref)))
    assert bool(jnp.allclose(out, ref, atol=1e-1, rtol=1e-1)), \
        f"max abs err vs f32 ref {err}"

    print("KERNEL_OK")
</pallas_src>

<mosaic_0001>
module attributes {stable_mosaic.version = 11 : i64} {
  func.func @_ffn_kernel(%arg0: i32, %arg1: i32, %arg2: memref<64x128xf32, #tpu.memory_space<vmem>>, %arg3: memref<128x256xbf16, #tpu.memory_space<vmem>>, %arg4: memref<1x256xf32, #tpu.memory_space<vmem>>, %arg5: memref<256x128xbf16, #tpu.memory_space<vmem>>, %arg6: memref<1x128xf32, #tpu.memory_space<vmem>>, %arg7: memref<64x128xf32, #tpu.memory_space<vmem>>, %arg8: memref<64x128xf32, #tpu.memory_space<vmem>>) attributes {dimension_semantics = [#tpu.dimension_semantics<parallel>, #tpu.dimension_semantics<arbitrary>], iteration_bounds = array<i64: 2, 2>, scalar_prefetch = 0 : i64, scratch_operands = 1 : i64, tpu.core_type = #tpu.core_type<tc>, window_params = [{transform_indices = @transform_0, window_bounds = array<i64: 64, 128>}, {transform_indices = @transform_1, window_bounds = array<i64: 128, 256>}, {transform_indices = @transform_2, window_bounds = array<i64: 1, 256>}, {transform_indices = @transform_3, window_bounds = array<i64: 256, 128>}, {pipeline_mode = #tpu.pipeline_mode<synchronous>, transform_indices = @transform_4, window_bounds = array<i64: 1, 128>}, {transform_indices = @transform_5, window_bounds = array<i64: 64, 128>}]} {
    %c0_i32 = arith.constant 0 : i32
    %0 = arith.cmpi eq, %arg1, %c0_i32 : i32
    %1 = arith.extui %0 : i1 to i32
    %c0_i32_0 = arith.constant 0 : i32
    %2 = arith.cmpi ne, %1, %c0_i32_0 : i32
    scf.if %2 {
      %cst_17 = arith.constant 0.000000e+00 : f32
      %27 = vector.broadcast %cst_17 : f32 to vector<64x128xf32>
      %c0_18 = arith.constant 0 : index
      %c0_19 = arith.constant 0 : index
      %28 = vector.load %arg8[%c0_18, %c0_19] : memref<64x128xf32, #tpu.memory_space<vmem>>, vector<64x128xf32>
      tpu.vector_store %arg8[%c0_18, %c0_19], %27 {strides = array<i32>} : memref<64x128xf32, #tpu.memory_space<vmem>>, vector<64x128xf32>,
    } else {
    }
    %c0 = arith.constant 0 : index
    %c0_1 = arith.constant 0 : index
    %3 = vector.load %arg2[%c0, %c0_1] : memref<64x128xf32, #tpu.memory_space<vmem>>, vector<64x128xf32>
    %4 = arith.truncf %3 : vector<64x128xf32> to vector<64x128xbf16>
    %c0_2 = arith.constant 0 : index
    %c0_3 = arith.constant 0 : index
    %5 = vector.load %arg3[%c0_2, %c0_3] : memref<128x256xbf16, #tpu.memory_space<vmem>>, vector<128x256xbf16>
    %cst = arith.constant dense<0.000000e+00> : vector<64x256xf32>
    %6 = tpu.matmul %4, %5, %cst {dimension_numbers = #tpu.dot_dimension_numbers<[1], [0], [0], [1], [0, 0, 1, 1], [], []>} : vector<64x128xbf16>, vector<128x256xbf16>, vector<64x256xf32> -> vector<64x256xf32>
    %c0_4 = arith.constant 0 : index
    %c0_5 = arith.constant 0 : index
    %7 = vector.load %arg4[%c0_4, %c0_5] : memref<1x256xf32, #tpu.memory_space<vmem>>, vector<1x256xf32>
    %8 = vector.broadcast %7 : vector<1x256xf32> to vector<64x256xf32>
    %9 = arith.addf %6, %8 : vector<64x256xf32>
    %cst_6 = arith.constant 5.000000e-01 : f32
    %10 = vector.broadcast %cst_6 : f32 to vector<64x256xf32>
    %11 = arith.mulf %10, %9 : vector<64x256xf32>
    %cst_7 = arith.constant 0.707106769 : f32
    %12 = vector.broadcast %cst_7 : f32 to vector<64x256xf32>
    %13 = arith.mulf %9, %12 : vector<64x256xf32>
    %14 = math.erf %13 : vector<64x256xf32>
    %cst_8 = arith.constant 1.000000e+00 : f32
    %15 = vector.broadcast %cst_8 : f32 to vector<64x256xf32>
    %16 = arith.addf %15, %14 : vector<64x256xf32>
    %17 = arith.mulf %11, %16 : vector<64x256xf32>
    %c0_9 = arith.constant 0 : index
    %c0_10 = arith.constant 0 : index
    %18 = vector.load %arg8[%c0_9, %c0_10] : memref<64x128xf32, #tpu.memory_space<vmem>>, vector<64x128xf32>
    %19 = arith.truncf %17 : vector<64x256xf32> to vector<64x256xbf16>
    %c0_11 = arith.constant 0 : index
    %c0_12 = arith.constant 0 : index
    %20 = vector.load %arg5[%c0_11, %c0_12] : memref<256x128xbf16, #tpu.memory_space<vmem>>, vector<256x128xbf16>
    %cst_13 = arith.constant dense<0.000000e+00> : vector<64x128xf32>
    %21 = tpu.matmul %19, %20, %cst_13 {dimension_numbers = #tpu.dot_dimension_numbers<[1], [0], [0], [1], [0, 0, 1, 1], [], []>} : vector<64x256xbf16>, vector<256x128xbf16>, vector<64x128xf32> -> vector<64x128xf32>
    %22 = arith.addf %18, %21 : vector<64x128xf32>
    %c0_14 = arith.constant 0 : index
    %c0_15 = arith.constant 0 : index
    %23 = vector.load %arg8[%c0_14, %c0_15] : memref<64x128xf32, #tpu.memory_space<vmem>>, vector<64x128xf32>
    tpu.vector_store %arg8[%c0_14, %c0_15], %22 {strides = array<i32>} : memref<64x128xf32, #tpu.memory_space<vmem>>, vector<64x128xf32>,
    %c1_i32 = arith.constant 1 : i32
    %24 = arith.cmpi eq, %arg1, %c1_i32 : i32
    %25 = arith.extui %24 : i1 to i32
    %c0_i32_16 = arith.constant 0 : i32
    %26 = arith.cmpi ne, %25, %c0_i32_16 : i32
    scf.if %26 {
      %c0_17 = arith.constant 0 : index
      %c0_18 = arith.constant 0 : index
      %27 = vector.load %arg8[%c0_17, %c0_18] : memref<64x128xf32, #tpu.memory_space<vmem>>, vector<64x128xf32>
      %c0_19 = arith.constant 0 : index
      %c0_20 = arith.constant 0 : index
      %28 = vector.load %arg6[%c0_19, %c0_20] : memref<1x128xf32, #tpu.memory_space<vmem>>, vector<1x128xf32>
      %29 = vector.broadcast %28 : vector<1x128xf32> to vector<64x128xf32>
      %30 = arith.addf %27, %29 : vector<64x128xf32>
      %c0_21 = arith.constant 0 : index
      %c0_22 = arith.constant 0 : index
      %31 = vector.load %arg7[%c0_21, %c0_22] : memref<64x128xf32, #tpu.memory_space<vmem>>, vector<64x128xf32>
      tpu.vector_store %arg7[%c0_21, %c0_22], %30 {strides = array<i32>} : memref<64x128xf32, #tpu.memory_space<vmem>>, vector<64x128xf32>,
    } else {
    }
    return
  }
  func.func @transform_0(%arg0: i32, %arg1: i32) -> (i32, i32) {
    %c0_i32 = arith.constant 0 : i32
    %c0_i32_0 = arith.constant 0 : i32
    return %arg0, %c0_i32 : i32, i32
  }
  func.func @transform_1(%arg0: i32, %arg1: i32) -> (i32, i32) {
    %c0_i32 = arith.constant 0 : i32
    %c0_i32_0 = arith.constant 0 : i32
    return %c0_i32, %arg1 : i32, i32
  }
  func.func @transform_2(%arg0: i32, %arg1: i32) -> (i32, i32) {
    %c0_i32 = arith.constant 0 : i32
    %c0_i32_0 = arith.constant 0 : i32
    return %c0_i32, %arg1 : i32, i32
  }
  func.func @transform_3(%arg0: i32, %arg1: i32) -> (i32, i32) {
    %c0_i32 = arith.constant 0 : i32
    %c0_i32_0 = arith.constant 0 : i32
    return %arg1, %c0_i32 : i32, i32
  }
  func.func @transform_4(%arg0: i32, %arg1: i32) -> (i32, i32) {
    %c0_i32 = arith.constant 0 : i32
    %c0_i32_0 = arith.constant 0 : i32
    %c0_i32_1 = arith.constant 0 : i32
    return %c0_i32, %c0_i32_0 : i32, i32
  }
  func.func @transform_5(%arg0: i32, %arg1: i32) -> (i32, i32) {
    %c0_i32 = arith.constant 0 : i32
    %c0_i32_0 = arith.constant 0 : i32
    return %arg0, %c0_i32 : i32, i32
  }
}

</mosaic_0001>

<llo_original>
// kernel: feed_forward.1
$region0: #{feed_forward.1}
  #allocation0 [shape = 'u32[]', space=smem, size = 0x4, offset = 0x4, fixed_abs, tag = 'smem constant byte address 0x4 - core index']
  #allocation1 [shape = 'u32[144,128]{1,0:T(1,128)}', space=vmem, size = 0x12000, scoped, tag = 'internal scratch']
  #allocation2 [shape = 'f32[64,128]{1,0:T(8,128)}', space=vmem, size = 0x8000, scoped, tag = 'scratch operand']
  %s0 = inlined_call_operand.vmem [shape: f32[128,128], index: 0, kind: input, shape index: {}]
  %s1 = inlined_call_operand.vmem [shape: bf16[128,512], index: 1, kind: input, shape index: {}]
  %s2 = inlined_call_operand.vmem [shape: f32[1,512], index: 2, kind: input, shape index: {}]
  %s3 = inlined_call_operand.vmem [shape: bf16[512,128], index: 3, kind: input, shape index: {}]
  %s4 = inlined_call_operand.vmem [shape: f32[1,128], index: 4, kind: input, shape index: {}]
  %s5 = inlined_call_operand.hbm [shape: f32[128,128], index: 5, kind: output, shape index: {}]
  %s6 = sld [smem:[#allocation0]]
  $region99: #{feed_forward.1} parent=0
    _
  %s8 = ssub.s32 1, %s6
  %s9 = scalar_select 0, %s8, %s6
  $region1: #{feed_forward.1} parent=0
    #allocation3 [shape = 'u8[131072]{0}', space=vmem, size = 0x20000, scoped, tag = 'input window, operand 1']
    #allocation4 [shape = 'u8[65536]{0}', space=vmem, size = 0x10000, scoped, tag = 'output window, operand 0']
    #allocation5 [shape = 's32[2]{0}', space=sflag, size = 0x8, scoped, tag = 'scoped memory for feed_forward.1']
    %10 = vsyncpa [#allocation5], 0
    %s11 = scalar_lea.sflag [#allocation5], 1
    %12 = vsyncpa %s11, 0
    loop: start=0, step=1, limit=6
    $region2: #{feed_forward.1} parent=1 // loop_pre_header
      _
    $region3: #{feed_forward.1} parent=1 // loop_header
      %s14 = sphi 0, %s18
      %p15 = scmp.ge.s32.totalorder %s14, 6
      %s21 = sphi 0, %s33
      %s22 = sphi 0, %s29
      %s23 = sphi 0, %s21
      %s24 = sphi 0, %s22
      %s25 = sphi 0, %s23
      %s26 = sphi 0, %s24
      %s36 = sphi 0, %s38
      %s39 = sphi 0, %s36
      %s40 = sphi 0, %s39
      %s56 = sphi 0, %s40
      %s62 = sphi 0, %s64
      %s65 = sphi 0, %s62
      %s66 = sphi 0, %s65
      %s82 = sphi 0, %s66
      %s88 = sphi 0, %s90
      %s91 = sphi 0, %s88
      %s92 = sphi 0, %s91
      %s108 = sphi 0, %s92
      %s114 = sphi 0, %s116
      %s117 = sphi 0, %s114
      %s118 = sphi 0, %s117
      %s134 = sphi 0, %s118
      %s138 = sphi 0, %s138
      %s140 = sphi 0, %s138
      %s141 = sphi 0, %s140
      %s155 = sphi 0, %s141
      %s161 = sphi 0, %s163
      %s164 = sphi 0, %s161
      %s165 = sphi 0, %s164
      %s181 = sphi 0, %s165
    $region4: #{feed_forward.1} parent=1 // loop_header_branch
      %17 = sbr.rel (%p15) target = $region8
    $region5: #{feed_forward.1} parent=1 // loop_body
      %s19 = ssub.s32 %s14, 1
      %s20 = ssub.s32 %s14, 2
      %s27 = sadd.s32 1, %s22
      %p28 = scmp.ge.s32.totalorder %s27, 2
      %s29 = scalar_select %p28, 0, %s27
      %s30 = sadd.s32 1, %s21
      %s31 = scalar_select %p28, %s30, %s21
      %p32 = scmp.ge.s32.totalorder %s31, 2
      %s33 = scalar_select %p32, 0, %s31
      %s34 = ssub.s32 %s21, %s33
      %p35 = scmp.eq.s32.totalorder %s34, 0
      %s37 = sadd.s32 %s36, 1
      %s38 = scalar_select %p35, %s36, %s37
      %p41 = pneg %p35
      %p42 = scmp.eq.s32.totalorder %s14, 3
      %p43 = por %p41, %p42
      %p44 = scmp.ne.s32.totalorder %s36, %s39
      %p45 = scmp.eq.s32.totalorder %s14, 0
      %p46 = por %p44, %p45
      %p47 = scmp.ne.s32.totalorder %s36, %s39
      %p48 = scmp.eq.s32.totalorder %s19, 3
      %p49 = por %p47, %p48
      %p50 = scmp.ne.s32.totalorder %s39, %s40
      %p51 = scmp.eq.s32.totalorder %s19, 0
      %p52 = por %p50, %p51
      %p53 = scmp.ne.s32.totalorder %s39, %s40
      %p54 = scmp.eq.s32.totalorder %s20, 3
      %p55 = por %p53, %p54
      %p57 = scmp.ne.s32.totalorder %s40, %s56
      %p58 = scmp.eq.s32.totalorder %s20, 0
      %p59 = por %p57, %p58
      %s60 = ssub.s32 %s22, %s29
      %p61 = scmp.eq.s32.totalorder %s60, 0
      %s63 = sadd.s32 %s62, 1
      %s64 = scalar_select %p61, %s62, %s63
      %p67 = pneg %p61
      %p68 = scmp.eq.s32.totalorder %s14, 3
      %p69 = por %p67, %p68
      %p70 = scmp.ne.s32.totalorder %s62, %s65
      %p71 = scmp.eq.s32.totalorder %s14, 0
      %p72 = por %p70, %p71
      %p73 = scmp.ne.s32.totalorder %s62, %s65
      %p74 = scmp.eq.s32.totalorder %s19, 3
      %p75 = por %p73, %p74
      %p76 = scmp.ne.s32.totalorder %s65, %s66
      %p77 = scmp.eq.s32.totalorder %s19, 0
      %p78 = por %p76, %p77
      %p79 = scmp.ne.s32.totalorder %s65, %s66
      %p80 = scmp.eq.s32.totalorder %s20, 3
      %p81 = por %p79, %p80
      %p83 = scmp.ne.s32.totalorder %s66, %s82
      %p84 = scmp.eq.s32.totalorder %s20, 0
      %p85 = por %p83, %p84
      %s86 = ssub.s32 %s22, %s29
      %p87 = scmp.eq.s32.totalorder %s86, 0
      %s89 = sadd.s32 %s88, 1
      %s90 = scalar_select %p87, %s88, %s89
      %p93 = pneg %p87
      %p94 = scmp.eq.s32.totalorder %s14, 3
      %p95 = por %p93, %p94
      %p96 = scmp.ne.s32.totalorder %s88, %s91
      %p97 = scmp.eq.s32.totalorder %s14, 0
      %p98 = por %p96, %p97
      %p99 = scmp.ne.s32.totalorder %s88, %s91
      %p100 = scmp.eq.s32.totalorder %s19, 3
      %p101 = por %p99, %p100
      %p102 = scmp.ne.s32.totalorder %s91, %s92
      %p103 = scmp.eq.s32.totalorder %s19, 0
      %p104 = por %p102, %p103
      %p105 = scmp.ne.s32.totalorder %s91, %s92
      %p106 = scmp.eq.s32.totalorder %s20, 3
      %p107 = por %p105, %p106
      %p109 = scmp.ne.s32.totalorder %s92, %s108
      %p110 = scmp.eq.s32.totalorder %s20, 0
      %p111 = por %p109, %p110
      %s112 = ssub.s32 %s22, %s29
      %p113 = scmp.eq.s32.totalorder %s112, 0
      %s115 = sadd.s32 %s114, 1
      %s116 = scalar_select %p113, %s114, %s115
      %p119 = pneg %p113
      %p120 = scmp.eq.s32.totalorder %s14, 3
      %p121 = por %p119, %p120
      %p122 = scmp.ne.s32.totalorder %s114, %s117
      %p123 = scmp.eq.s32.totalorder %s14, 0
      %p124 = por %p122, %p123
      %p125 = scmp.ne.s32.totalorder %s114, %s117
      %p126 = scmp.eq.s32.totalorder %s19, 3
      %p127 = por %p125, %p126
      %p128 = scmp.ne.s32.totalorder %s117, %s118
      %p129 = scmp.eq.s32.totalorder %s19, 0
      %p130 = por %p128, %p129
      %p131 = scmp.ne.s32.totalorder %s117, %s118
      %p132 = scmp.eq.s32.totalorder %s20, 3
      %p133 = por %p131, %p132
      %p135 = scmp.ne.s32.totalorder %s118, %s134
      %p136 = scmp.eq.s32.totalorder %s20, 0
      %p137 = por %p135, %p136
      %s139 = sadd.s32 %s138, 1
      %p142 = scmp.eq.s32.totalorder %s14, 3
      %p143 = scmp.ne.s32.totalorder %s138, %s140
      %p144 = scmp.eq.s32.totalorder %s14, 0
      %p145 = por %p143, %p144
      %p146 = scmp.ne.s32.totalorder %s138, %s140
      %p147 = scmp.eq.s32.totalorder %s19, 3
      %p148 = por %p146, %p147
      %p149 = scmp.ne.s32.totalorder %s140, %s141
      %p150 = scmp.eq.s32.totalorder %s19, 0
      %p151 = por %p149, %p150
      %p152 = scmp.ne.s32.totalorder %s140, %s141
      %p153 = scmp.eq.s32.totalorder %s20, 3
      %p154 = por %p152, %p153
      %p156 = scmp.ne.s32.totalorder %s141, %s155
      %p157 = scmp.eq.s32.totalorder %s20, 0
      %p158 = por %p156, %p157
      %s159 = ssub.s32 %s21, %s33
      %p160 = scmp.eq.s32.totalorder %s159, 0
      %s162 = sadd.s32 %s161, 1
      %s163 = scalar_select %p160, %s161, %s162
      %p166 = pneg %p160
      %p167 = scmp.eq.s32.totalorder %s14, 3
      %p168 = por %p166, %p167
      %p169 = scmp.ne.s32.totalorder %s161, %s164
      %p170 = scmp.eq.s32.totalorder %s14, 0
      %p171 = por %p169, %p170
      %p172 = scmp.ne.s32.totalorder %s161, %s164
      %p173 = scmp.eq.s32.totalorder %s19, 3
      %p174 = por %p172, %p173
      %p175 = scmp.ne.s32.totalorder %s164, %s165
      %p176 = scmp.eq.s32.totalorder %s19, 0
      %p177 = por %p175, %p176
      %p178 = scmp.ne.s32.totalorder %s164, %s165
      %p179 = scmp.eq.s32.totalorder %s20, 3
      %p180 = por %p178, %p179
      %p182 = scmp.ne.s32.totalorder %s165, %s181
      %p183 = scmp.eq.s32.totalorder %s20, 0
      %p184 = por %p182, %p183
      %p185 = scmp.le.s32.totalorder 1, %s14
      %p186 = scmp.lt.s32.totalorder %s14, 5
      %p187 = pnand %p185, %p186
      %p188 = pneg %p187
      // Predicated region
      $region9: #{feed_forward.1} parent=5 // pred_check
        _
      $region10: #{feed_forward.1} parent=5 // pred_check_branch
        %190 = sbr.rel (%p187) target = $region12
      $region11: #{feed_forward.1} parent=5 // pred_region
        %s191 = ssub.s32 %s14, 1
        // Predicated region
        $region13: #{feed_forward.1} parent=11 // pred_check
          %p192 = pneg %p151
        $region14: #{feed_forward.1} parent=11 // pred_check_branch
          %194 = sbr.rel (%p192) target = $region16
        $region15: #{feed_forward.1} parent=11 // pred_region
          _
        $region16: #{feed_forward.1} parent=11 // pred_fallthru
          _
      $region12: #{feed_forward.1} parent=5 // pred_fallthru
        _
      %p195 = scmp.lt.s32.totalorder %s14, 4
      // Predicated region
      $region17: #{feed_forward.1} parent=5 // pred_check
        %p196 = pneg %p195
      $region18: #{feed_forward.1} parent=5 // pred_check_branch
        %198 = sbr.rel (%p196) target = $region20
      $region19: #{feed_forward.1} parent=5 // pred_region
        // Predicated region
        $region21: #{feed_forward.1} parent=19 // pred_check
          %p199 = pneg %p46
        $region22: #{feed_forward.1} parent=19 // pred_check_branch
          %201 = sbr.rel (%p199) target = $region24
        $region23: #{feed_forward.1} parent=19 // pred_region
          %s202 = smul.u32 8, %s21
          %p203 = scmp.lt.s32.totalorder %s202, 15
          %s204 = scalar_select %p203, %s202, 15
          %s205 = smul.addr %s204, 8
          %s206 = scalar_lea.vmem %s0, %s205
          %s207 = smul.u32 8, %s21
        $region24: #{feed_forward.1} parent=19 // pred_fallthru
          _
        // Predicated region
        $region25: #{feed_forward.1} parent=19 // pred_check
          %p208 = pneg %p72
        $region26: #{feed_forward.1} parent=19 // pred_check_branch
          %210 = sbr.rel (%p208) target = $region28
        $region27: #{feed_forward.1} parent=19 // pred_region
          %s211 = sand.u32 %s62, 1
          %s212 = sand.u32 %s62, 1
          %s213 = smul.addr %s212, 128
          %s214 = scalar_lea.vmem [#allocation3], %s213
          %s215 = smul.u32 2, %s22
          %s216 = smul.addr %s215, 4
          %s217 = scalar_lea.vmem %s1, %s216
          // Predicated region
          $region29: #{feed_forward.1} parent=27 // pred_check
            _
          $region30: #{feed_forward.1} parent=27 // pred_check_branch
            %219 = sbr.rel (0) target = $region32
          $region31: #{feed_forward.1} parent=27 // pred_region
            // Predicated region
            $region33: #{feed_forward.1} parent=31 // pred_check
              _
            $region34: #{feed_forward.1} parent=31 // pred_check_branch
              %221 = sbr.rel (0) target = $region36
            $region35: #{feed_forward.1} parent=31 // pred_region
              // Predicated region
              $region48: #{feed_forward.1} parent=35 // pred_check
                _
              $region49: #{feed_forward.1} parent=35 // pred_check_branch
                %266 = sbr.rel (0) target = $region51
              $region50: #{feed_forward.1} parent=35 // pred_region
                loop: start=0, step=1, limit=1
                $region52: #{feed_forward.1} parent=50 // loop_pre_header
                  _
                $region53: #{feed_forward.1} parent=50 // loop_header
                  %s268 = sphi 0, %s272
                  %p269 = scmp.ge.s32.totalorder %s268, 1
                  %s273 = sphi %s217, %s217
                  %s274 = sphi %s214, %s214
                $region54: #{feed_forward.1} parent=50 // loop_header_branch
                  %271 = sbr.rel (%p269) target = $region58
                $region55: #{feed_forward.1} parent=50 // loop_body
                  %v275 = vld [vmem:[%s273] sm:$0xff]
                  %276 = vst [vmem:[%s274] sm:$0xff] %v275
                  %v277 = vld [vmem:[%s273 + $0x10] sm:$0xff]
                  %278 = vst [vmem:[%s274 + $0x8] sm:$0xff] %v277
                  %v279 = vld [vmem:[%s273 + $0x20] sm:$0xff]
                  %280 = vst [vmem:[%s274 + $0x10] sm:$0xff] %v279
                  %v281 = vld [vmem:[%s273 + $0x30] sm:$0xff]
                  %282 = vst [vmem:[%s274 + $0x18] sm:$0xff] %v281
                  %v283 = vld [vmem:[%s273 + $0x40] sm:$0xff]
                  %284 = vst [vmem:[%s274 + $0x20] sm:$0xff] %v283
                  %v285 = vld [vmem:[%s273 + $0x50] sm:$0xff]
                  %286 = vst [vmem:[%s274 + $0x28] sm:$0xff] %v285
                  %v287 = vld [vmem:[%s273 + $0x60] sm:$0xff]
                  %288 = vst [vmem:[%s274 + $0x30] sm:$0xff] %v287
                  %v289 = vld [vmem:[%s273 + $0x70] sm:$0xff]
                  %290 = vst [vmem:[%s274 + $0x38] sm:$0xff] %v289
                  %v291 = vld [vmem:[%s273 + $0x80] sm:$0xff]
                  %292 = vst [vmem:[%s274 + $0x40] sm:$0xff] %v291
                  %v293 = vld [vmem:[%s273 + $0x90] sm:$0xff]
                  %294 = vst [vmem:[%s274 + $0x48] sm:$0xff] %v293
                  %v295 = vld [vmem:[%s273 + $0xa0] sm:$0xff]
                  %296 = vst [vmem:[%s274 + $0x50] sm:$0xff] %v295
                  %v297 = vld [vmem:[%s273 + $0xb0] sm:$0xff]
                  %298 = vst [vmem:[%s274 + $0x58] sm:$0xff] %v297
                  %v299 = vld [vmem:[%s273 + $0xc0] sm:$0xff]
                  %300 = vst [vmem:[%s274 + $0x60] sm:$0xff] %v299
                  %v301 = vld [vmem:[%s273 + $0xd0] sm:$0xff]
                  %302 = vst [vmem:[%s274 + $0x68] sm:$0xff] %v301
                  %v303 = vld [vmem:[%s273 + $0xe0] sm:$0xff]
                  %304 = vst [vmem:[%s274 + $0x70] sm:$0xff] %v303
                  %v305 = vld [vmem:[%s273 + $0xf0] sm:$0xff]
                  %306 = vst [vmem:[%s274 + $0x78] sm:$0xff] %v305
                $region56: #{feed_forward.1} parent=50 // loop_footer
                  %s272 = sadd.s32 1, %s268
                $region57: #{feed_forward.1} parent=50 // loop_footer_branch
                  %267 = sbr.rel target = $region53
                $region58: #{feed_forward.1} parent=50 // loop_exit
                  _
              $region51: #{feed_forward.1} parent=35 // pred_fallthru
                _
              // Predicated region
              $region59: #{feed_forward.1} parent=35 // pred_check
                _
              $region60: #{feed_forward.1} parent=35 // pred_check_branch
                %308 = sbr.rel target = $region62
              $region61: #{feed_forward.1} parent=35 // pred_region
                _
              $region62: #{feed_forward.1} parent=35 // pred_fallthru
                _
            $region36: #{feed_forward.1} parent=31 // pred_fallthru
              _
            // Predicated region
            $region37: #{feed_forward.1} parent=31 // pred_check
              _
            $region38: #{feed_forward.1} parent=31 // pred_check_branch
              %223 = sbr.rel target = $region40
            $region39: #{feed_forward.1} parent=31 // pred_region
              loop: start=0, step=1, limit=1
              $region41: #{feed_forward.1} parent=39 // loop_pre_header
                _
              $region42: #{feed_forward.1} parent=39 // loop_header
                %s226 = sphi 0, %s230
                %p227 = scmp.ge.s32.totalorder %s226, 1
                %s231 = sphi %s217, %s217
                %s232 = sphi %s214, %s214
              $region43: #{feed_forward.1} parent=39 // loop_header_branch
                %229 = sbr.rel (%p227) target = $region47
              $region44: #{feed_forward.1} parent=39 // loop_body
                %v233 = vld [vmem:[%s231] sm:$0xff]
                %234 = vst [vmem:[%s232] sm:$0xff] %v233
                %v235 = vld [vmem:[%s231 + $0x10] sm:$0xff]
                %236 = vst [vmem:[%s232 + $0x8] sm:$0xff] %v235
                %v237 = vld [vmem:[%s231 + $0x20] sm:$0xff]
                %238 = vst [vmem:[%s232 + $0x10] sm:$0xff] %v237
                %v239 = vld [vmem:[%s231 + $0x30] sm:$0xff]
                %240 = vst [vmem:[%s232 + $0x18] sm:$0xff] %v239
                %v241 = vld [vmem:[%s231 + $0x40] sm:$0xff]
                %242 = vst [vmem:[%s232 + $0x20] sm:$0xff] %v241
                %v243 = vld [vmem:[%s231 + $0x50] sm:$0xff]
                %244 = vst [vmem:[%s232 + $0x28] sm:$0xff] %v243
                %v245 = vld [vmem:[%s231 + $0x60] sm:$0xff]
                %246 = vst [vmem:[%s232 + $0x30] sm:$0xff] %v245
                %v247 = vld [vmem:[%s231 + $0x70] sm:$0xff]
                %248 = vst [vmem:[%s232 + $0x38] sm:$0xff] %v247
                %v249 = vld [vmem:[%s231 + $0x80] sm:$0xff]
                %250 = vst [vmem:[%s232 + $0x40] sm:$0xff] %v249
                %v251 = vld [vmem:[%s231 + $0x90] sm:$0xff]
                %252 = vst [vmem:[%s232 + $0x48] sm:$0xff] %v251
                %v253 = vld [vmem:[%s231 + $0xa0] sm:$0xff]
                %254 = vst [vmem:[%s232 + $0x50] sm:$0xff] %v253
                %v255 = vld [vmem:[%s231 + $0xb0] sm:$0xff]
                %256 = vst [vmem:[%s232 + $0x58] sm:$0xff] %v255
                %v257 = vld [vmem:[%s231 + $0xc0] sm:$0xff]
                %258 = vst [vmem:[%s232 + $0x60] sm:$0xff] %v257
                %v259 = vld [vmem:[%s231 + $0xd0] sm:$0xff]
                %260 = vst [vmem:[%s232 + $0x68] sm:$0xff] %v259
                %v261 = vld [vmem:[%s231 + $0xe0] sm:$0xff]
                %262 = vst [vmem:[%s232 + $0x70] sm:$0xff] %v261
                %v263 = vld [vmem:[%s231 + $0xf0] sm:$0xff]
                %264 = vst [vmem:[%s232 + $0x78] sm:$0xff] %v263
              $region45: #{feed_forward.1} parent=39 // loop_footer
                %s230 = sadd.s32 1, %s226
              $region46: #{feed_forward.1} parent=39 // loop_footer_branch
                %225 = sbr.rel target = $region42
              $region47: #{feed_forward.1} parent=39 // loop_exit
                _
            $region40: #{feed_forward.1} parent=31 // pred_fallthru
              _
          $region32: #{feed_forward.1} parent=27 // pred_fallthru
            _
          %309 = vnop
        $region28: #{feed_forward.1} parent=19 // pred_fallthru
          _
        // Predicated region
        $region63: #{feed_forward.1} parent=19 // pred_check
          %p310 = pneg %p98
        $region64: #{feed_forward.1} parent=19 // pred_check_branch
          %312 = sbr.rel (%p310) target = $region66
        $region65: #{feed_forward.1} parent=19 // pred_region
          %s313 = smul.u32 2, %s22
          %p314 = scmp.lt.s32.totalorder %s313, 3
          %s315 = scalar_select %p314, %s313, 3
          %s316 = scalar_lea.vmem %s2, %s315
          %s317 = smul.u32 2, %s22
        $region66: #{feed_forward.1} parent=19 // pred_fallthru
          _
        // Predicated region
        $region67: #{feed_forward.1} parent=19 // pred_check
          %p318 = pneg %p124
        $region68: #{feed_forward.1} parent=19 // pred_check_branch
          %320 = sbr.rel (%p318) target = $region70
        $region69: #{feed_forward.1} parent=19 // pred_region
          %s321 = smul.u32 32, %s22
          %p322 = scmp.lt.s32.totalorder %s321, 63
          %s323 = scalar_select %p322, %s321, 63
          %s324 = smul.addr %s323, 4
          %s325 = scalar_lea.vmem %s3, %s324
          %s326 = smul.u32 32, %s22
        $region70: #{feed_forward.1} parent=19 // pred_fallthru
          _
      $region20: #{feed_forward.1} parent=5 // pred_fallthru
        _
      %p327 = scmp.le.s32.totalorder 1, %s14
      %p328 = scmp.lt.s32.totalorder %s14, 5
      %p329 = pnand %p327, %p328
      %p330 = pneg %p329
      // Predicated region
      $region71: #{feed_forward.1} parent=5 // pred_check
        _
      $region72: #{feed_forward.1} parent=5 // pred_check_branch
        %332 = sbr.rel (%p329) target = $region74
      $region73: #{feed_forward.1} parent=5 // pred_region
        %s333 = ssub.s32 %s14, 1
        %s334 = sand.u32 %s65, 1
        %s335 = sand.u32 %s65, 1
        %s336 = smul.addr %s335, 128
        %s337 = scalar_lea.vmem [#allocation3], %s336
        // Predicated region
        $region75: #{feed_forward.1} parent=73 // pred_check
          %p338 = pneg %p78
        $region76: #{feed_forward.1} parent=73 // pred_check_branch
          %340 = sbr.rel (%p338) target = $region78
        $region77: #{feed_forward.1} parent=73 // pred_region
          _
        $region78: #{feed_forward.1} parent=73 // pred_fallthru
          _
        %s341 = smul.u32 8, %s23
        %p342 = scmp.lt.s32.totalorder %s341, 15
        %s343 = scalar_select %p342, %s341, 15
        %s344 = smul.addr %s343, 8
        %s345 = scalar_lea.vmem %s0, %s344
        %p346 = pneg %p52
        %p347 = pneg %p49
        %s348 = sand.u32 %s65, 1
        %s349 = sand.u32 %s65, 1
        %s350 = smul.addr %s349, 128
        %s351 = scalar_lea.vmem [#allocation3], %s350
        %p352 = pneg %p78
        %p353 = pneg %p75
        %s354 = smul.u32 2, %s24
        %p355 = scmp.lt.s32.totalorder %s354, 3
        %s356 = scalar_select %p355, %s354, 3
        %s357 = scalar_lea.vmem %s2, %s356
        %p358 = pneg %p104
        %p359 = pneg %p101
        %s360 = smul.u32 32, %s24
        %p361 = scmp.lt.s32.totalorder %s360, 63
        %s362 = scalar_select %p361, %s360, 63
        %s363 = smul.addr %s362, 4
        %s364 = scalar_lea.vmem %s3, %s363
        %p365 = pneg %p130
        %p366 = pneg %p127
        %p367 = pneg %p151
        %p368 = pneg %p148
        %p369 = pneg %p177
        %p370 = pneg %p174
        %s371 = sand.u32 %s164, 1
        %s372 = scalar_lea.sflag [#allocation5], %s371
        %s373 = sand.u32 %s164, 1
        %s374 = smul.addr %s373, 64
        %s375 = scalar_lea.vmem [#allocation4], %s374
        %s376 = smul.u32 8, %s23
        %p377 = scmp.lt.s32.totalorder %s376, 15
        %s378 = scalar_select %p377, %s376, 15
        %s379 = smul.addr %s378, 8
        %s380 = scalar_lea.vmem %s0, %s379
        %s381 = smul.u32 8, %s23
        %s382 = smul.u32 2, %s24
        %s383 = smul.u32 2, %s24
        %p384 = scmp.lt.s32.totalorder %s383, 3
        %s385 = scalar_select %p384, %s383, 3
        %s386 = scalar_lea.vmem %s2, %s385
        %s387 = smul.u32 2, %s24
        %s388 = smul.u32 32, %s24
        %p389 = scmp.lt.s32.totalorder %s388, 63
        %s390 = scalar_select %p389, %s388, 63
        %s391 = smul.addr %s390, 4
        %s392 = scalar_lea.vmem %s3, %s391
        %s393 = smul.u32 32, %s24
        %s394 = smul.u32 8, %s23
        %p396 = scmp.eq.s32.totalorder %s24, 0
        // Predicated region
        $region79: #{feed_forward.1} parent=73 // pred_check
          %p397 = pneg %p396
        $region80: #{feed_forward.1} parent=73 // pred_check_branch
          %399 = sbr.rel (%p397) target = $region82
        $region81: #{feed_forward.1} parent=73 // pred_region
          %400 = vst [vmem:[#allocation2] sm:$0xff] 0.0
          %401 = vst [vmem:[#allocation2 + $0x8] sm:$0xff] 0.0
          %402 = vst [vmem:[#allocation2 + $0x10] sm:$0xff] 0.0
          %403 = vst [vmem:[#allocation2 + $0x18] sm:$0xff] 0.0
          %404 = vst [vmem:[#allocation2 + $0x20] sm:$0xff] 0.0
          %405 = vst [vmem:[#allocation2 + $0x28] sm:$0xff] 0.0
          %406 = vst [vmem:[#allocation2 + $0x30] sm:$0xff] 0.0
          %407 = vst [vmem:[#allocation2 + $0x38] sm:$0xff] 0.0
        $region82: #{feed_forward.1} parent=73 // pred_fallthru
          _
        %v408 = vld [vmem:[%s380] sm:$0xff]
        %v409 = vld [vmem:[%s380 + $0x8] sm:$0xff]
        %v410 = vld [vmem:[%s380 + $0x10] sm:$0xff]
        %v411 = vld [vmem:[%s380 + $0x18] sm:$0xff]
        %v412 = vld [vmem:[%s380 + $0x20] sm:$0xff]
        %v413 = vld [vmem:[%s380 + $0x28] sm:$0xff]
        %v414 = vld [vmem:[%s380 + $0x30] sm:$0xff]
        %v415 = vld [vmem:[%s380 + $0x38] sm:$0xff]
        %v416 = vpack.c.bf16 %v409, %v408
        %v417 = vpack.c.bf16 %v411, %v410
        %v418 = vpack.c.bf16 %v413, %v412
        %v419 = vpack.c.bf16 %v415, %v414
        %v420 = vld [vmem:[%s337] sm:$0xff]
        %v421 = vld [vmem:[%s337 + $0x8] sm:$0xff]
        %v422 = vld [vmem:[%s337 + $0x10] sm:$0xff]
        %v423 = vld [vmem:[%s337 + $0x18] sm:$0xff]
        %v424 = vld [vmem:[%s337 + $0x20] sm:$0xff]
        %v425 = vld [vmem:[%s337 + $0x28] sm:$0xff]
        %v426 = vld [vmem:[%s337 + $0x30] sm:$0xff]
        %v427 = vld [vmem:[%s337 + $0x38] sm:$0xff]
        %v428 = vld [vmem:[%s337 + $0x40] sm:$0xff]
        %v429 = vld [vmem:[%s337 + $0x48] sm:$0xff]
        %v430 = vld [vmem:[%s337 + $0x50] sm:$0xff]
        %v431 = vld [vmem:[%s337 + $0x58] sm:$0xff]
        %v432 = vld [vmem:[%s337 + $0x60] sm:$0xff]
        %v433 = vld [vmem:[%s337 + $0x68] sm:$0xff]
        %v434 = vld [vmem:[%s337 + $0x70] sm:$0xff]
        %v435 = vld [vmem:[%s337 + $0x78] sm:$0xff]
        %v436 = vld [vmem:[%s386] sm:$0x3]
        %v438 = vlaneseq
        %v439 = vshrl.u32 %v438, 7
        %v440 = vsub.s32 0, %v439
        %v441 = vrot.slane %v436, %v440
        %v442 = vlaneseq
        %v443 = vshrl.u32 %v442, 7
        %v444 = vsub.s32 1, %v443
        %v445 = vrot.slane %v436, %v444
        %v464 = vunpack.c.l.b16 %v420
        %v465 = vunpack.c.h.b16 %v420
        %v466 = vunpack.c.l.b16 %v421
        %v467 = vunpack.c.h.b16 %v421
        %v468 = vunpack.c.l.b16 %v422
        %v469 = vunpack.c.h.b16 %v422
        %v470 = vunpack.c.l.b16 %v423
        %v471 = vunpack.c.h.b16 %v423
        %v472 = vunpack.c.l.b16 %v424
        %v473 = vunpack.c.h.b16 %v424
        %v474 = vunpack.c.l.b16 %v425
        %v475 = vunpack.c.h.b16 %v425
        %v476 = vunpack.c.l.b16 %v426
        %v477 = vunpack.c.h.b16 %v426
        %v478 = vunpack.c.l.b16 %v427
        %v479 = vunpack.c.h.b16 %v427
        %v480 = vunpack.c.l.b16 %v428
        %v481 = vunpack.c.h.b16 %v428
        %v482 = vunpack.c.l.b16 %v429
        %v483 = vunpack.c.h.b16 %v429
        %v484 = vunpack.c.l.b16 %v430
        %v485 = vunpack.c.h.b16 %v430
        %v486 = vunpack.c.l.b16 %v431
        %v487 = vunpack.c.h.b16 %v431
        %v488 = vunpack.c.l.b16 %v432
        %v489 = vunpack.c.h.b16 %v432
        %v490 = vunpack.c.l.b16 %v433
        %v491 = vunpack.c.h.b16 %v433
        %v492 = vunpack.c.l.b16 %v434
        %v493 = vunpack.c.h.b16 %v434
        %v494 = vunpack.c.l.b16 %v435
        %v495 = vunpack.c.h.b16 %v435
        %v496 = vpack.c.b16 %v466, %v464
        %v497 = vpack.c.b16 %v467, %v465
        %v498 = vpack.c.b16 %v470, %v468
        %v499 = vpack.c.b16 %v471, %v469
        %v500 = vpack.c.b16 %v474, %v472
        %v501 = vpack.c.b16 %v475, %v473
        %v502 = vpack.c.b16 %v478, %v476
        %v503 = vpack.c.b16 %v479, %v477
        %v504 = vpack.c.b16 %v482, %v480
        %v505 = vpack.c.b16 %v483, %v481
        %v506 = vpack.c.b16 %v486, %v484
        %v507 = vpack.c.b16 %v487, %v485
        %v508 = vpack.c.b16 %v490, %v488
        %v509 = vpack.c.b16 %v491, %v489
        %v510 = vpack.c.b16 %v494, %v492
        %v511 = vpack.c.b16 %v495, %v493
        %528 = vmatprep.subr.bf16.mxu0 %v497
        %529 = vmatpush1.bf16.msra.mxu0 %v496
        %530 = vmatprep.subr.bf16.mxu0 %v499
        %531 = vmatpush1.bf16.msra.mxu0 %v498
        %532 = vmatprep.subr.bf16.mxu0 %v501
        %533 = vmatpush1.bf16.msra.mxu0 %v500
        %534 = vmatprep.subr.bf16.mxu0 %v503
        %535 = vmatpush1.bf16.msra.mxu0 %v502
        %536 = vmatprep.subr.bf16.mxu0 %v505
        %537 = vmatpush1.bf16.msra.mxu0 %v504
        %538 = vmatprep.subr.bf16.mxu0 %v507
        %539 = vmatpush1.bf16.msra.mxu0 %v506
        %540 = vmatprep.subr.bf16.mxu0 %v509
        %541 = vmatpush1.bf16.msra.mxu0 %v508
        %542 = vmatprep.subr.bf16.mxu0 %v511
        %543 = vmatpush1.bf16.msra.mxu0 %v510
        %544 = vmatprep.subr.bf16.mxu0 0
        %545 = vmatpush1.bf16.msra.mxu0 0
        %546 = vmatprep.subr.bf16.mxu0 0
        %547 = vmatpush1.bf16.msra.mxu0 0
        %548 = vmatprep.subr.bf16.mxu0 0
        %549 = vmatpush1.bf16.msra.mxu0 0
        %550 = vmatprep.subr.bf16.mxu0 0
        %551 = vmatpush1.bf16.msra.mxu0 0
        %552 = vmatprep.subr.bf16.mxu0 0
        %553 = vmatpush1.bf16.msra.mxu0 0
        %554 = vmatprep.subr.bf16.mxu0 0
        %555 = vmatpush1.bf16.msra.mxu0 0
        %556 = vmatprep.subr.bf16.mxu0 0
        %557 = vmatpush1.bf16.msra.mxu0 0
        %558 = vmatprep.subr.bf16.mxu0 0
        %559 = vmatpush1.bf16.msra.mxu0 0
        %560 = vmatprep.mubr.bf16.mxu0 0
        %561 = vmatmul.mubr.bf16.gmra.mrb[0].mxu0 %v416
        %v562 = vpop.f32.mrb[0].mxu0
        %v563 = vadd.f32 %v441, %v562
        %v564 = vpop.f32.mrb[0].mxu0
        %v565 = vadd.f32 %v445, %v564
        %v566 = vpop.f32.mrb[0].mxu0
        %v567 = vadd.f32 %v441, %v566
        %v568 = vpop.f32.mrb[0].mxu0
        %v569 = vadd.f32 %v445, %v568
        %570 = vmatprep.mubr.bf16.mxu0 0
        %571 = vmatmul.mubr.bf16.gmra.mrb[0].mxu0 %v417
        %v572 = vpop.f32.mrb[0].mxu0
        %v573 = vadd.f32 %v441, %v572
        %v574 = vpop.f32.mrb[0].mxu0
        %v575 = vadd.f32 %v445, %v574
        %v576 = vpop.f32.mrb[0].mxu0
        %v577 = vadd.f32 %v441, %v576
        %v578 = vpop.f32.mrb[0].mxu0
        %v579 = vadd.f32 %v445, %v578
        %580 = vmatprep.mubr.bf16.mxu0 0
        %581 = vmatmul.mubr.bf16.gmra.mrb[0].mxu0 %v418
        %v582 = vpop.f32.mrb[0].mxu0
        %v583 = vadd.f32 %v441, %v582
        %v584 = vpop.f32.mrb[0].mxu0
        %v585 = vadd.f32 %v445, %v584
        %v586 = vpop.f32.mrb[0].mxu0
        %v587 = vadd.f32 %v441, %v586
        %v588 = vpop.f32.mrb[0].mxu0
        %v589 = vadd.f32 %v445, %v588
        %590 = vmatprep.mubr.bf16.mxu0 0
        %591 = vmatmul.mubr.bf16.gmra.mrb[0].mxu0 %v419
        %v592 = vpop.f32.mrb[0].mxu0
        %v593 = vadd.f32 %v441, %v592
        %v594 = vpop.f32.mrb[0].mxu0
        %v595 = vadd.f32 %v445, %v594
        %v596 = vpop.f32.mrb[0].mxu0
        %v597 = vadd.f32 %v441, %v596
        %v598 = vpop.f32.mrb[0].mxu0
        %v599 = vadd.f32 %v445, %v598
        %600 = vdwg.mxu0
        %v601 = vmul.f32 %v563, 0.5
        %v602 = vmul.f32 %v565, 0.5
        %v603 = vmul.f32 %v567, 0.5
        %v604 = vmul.f32 %v569, 0.5
        %v605 = vmul.f32 %v573, 0.5
        %v606 = vmul.f32 %v575, 0.5
        %v607 = vmul.f32 %v577, 0.5
        %v608 = vmul.f32 %v579, 0.5
        %v609 = vmul.f32 %v583, 0.5
        %v610 = vmul.f32 %v585, 0.5
        %v611 = vmul.f32 %v587, 0.5
        %v612 = vmul.f32 %v589, 0.5
        %v613 = vmul.f32 %v593, 0.5
        %v614 = vmul.f32 %v595, 0.5
        %v615 = vmul.f32 %v597, 0.5
        %v616 = vmul.f32 %v599, 0.5
        %v617 = vmul.f32 %v563, 0.70710677
        %v618 = vmul.f32 %v565, 0.70710677
        %v619 = vmul.f32 %v567, 0.70710677
        %v620 = vmul.f32 %v569, 0.70710677
        %v621 = vmul.f32 %v573, 0.70710677
        %v622 = vmul.f32 %v575, 0.70710677
        %v623 = vmul.f32 %v577, 0.70710677
        %v624 = vmul.f32 %v579, 0.70710677
        %v625 = vmul.f32 %v583, 0.70710677
        %v626 = vmul.f32 %v585, 0.70710677
        %v627 = vmul.f32 %v587, 0.70710677
        %v628 = vmul.f32 %v589, 0.70710677
        %v629 = vmul.f32 %v593, 0.70710677
        %v630 = vmul.f32 %v595, 0.70710677
        %v631 = vmul.f32 %v597, 0.70710677
        %v632 = vmul.f32 %v599, 0.70710677
        %v633 = verf.f32.pop %v617
        %v634 = verf.f32.pop %v618
        %v635 = verf.f32.pop %v619
        %v636 = verf.f32.pop %v620
        %v637 = verf.f32.pop %v621
        %v638 = verf.f32.pop %v622
        %v639 = verf.f32.pop %v623
        %v640 = verf.f32.pop %v624
        %v641 = verf.f32.pop %v625
        %v642 = verf.f32.pop %v626
        %v643 = verf.f32.pop %v627
        %v644 = verf.f32.pop %v628
        %v645 = verf.f32.pop %v629
        %v646 = verf.f32.pop %v630
        %v647 = verf.f32.pop %v631
        %v648 = verf.f32.pop %v632
        %v649 = vadd.f32 %v633, 1.0
        %v650 = vadd.f32 %v634, 1.0
        %v651 = vadd.f32 %v635, 1.0
        %v652 = vadd.f32 %v636, 1.0
        %v653 = vadd.f32 %v637, 1.0
        %v654 = vadd.f32 %v638, 1.0
        %v655 = vadd.f32 %v639, 1.0
        %v656 = vadd.f32 %v640, 1.0
        %v657 = vadd.f32 %v641, 1.0
        %v658 = vadd.f32 %v642, 1.0
        %v659 = vadd.f32 %v643, 1.0
        %v660 = vadd.f32 %v644, 1.0
        %v661 = vadd.f32 %v645, 1.0
        %v662 = vadd.f32 %v646, 1.0
        %v663 = vadd.f32 %v647, 1.0
        %v664 = vadd.f32 %v648, 1.0
        %v665 = vmul.f32 %v601, %v649
        %v666 = vmul.f32 %v602, %v650
        %v667 = vmul.f32 %v603, %v651
        %v668 = vmul.f32 %v604, %v652
        %v669 = vmul.f32 %v605, %v653
        %v670 = vmul.f32 %v606, %v654
        %v671 = vmul.f32 %v607, %v655
        %v672 = vmul.f32 %v608, %v656
        %v673 = vmul.f32 %v609, %v657
        %v674 = vmul.f32 %v610, %v658
        %v675 = vmul.f32 %v611, %v659
        %v676 = vmul.f32 %v612, %v660
        %v677 = vmul.f32 %v613, %v661
        %v678 = vmul.f32 %v614, %v662
        %v679 = vmul.f32 %v615, %v663
        %v680 = vmul.f32 %v616, %v664
        %v681 = vld [vmem:[#allocation2] sm:$0xff]
        %v682 = vld [vmem:[#allocation2 + $0x8] sm:$0xff]
        %v683 = vld [vmem:[#allocation2 + $0x10] sm:$0xff]
        %v684 = vld [vmem:[#allocation2 + $0x18] sm:$0xff]
        %v685 = vld [vmem:[#allocation2 + $0x20] sm:$0xff]
        %v686 = vld [vmem:[#allocation2 + $0x28] sm:$0xff]
        %v687 = vld [vmem:[#allocation2 + $0x30] sm:$0xff]
        %v688 = vld [vmem:[#allocation2 + $0x38] sm:$0xff]
        %v689 = vpack.c.bf16 %v667, %v665
        %v690 = vpack.c.bf16 %v668, %v666
        %v691 = vpack.c.bf16 %v671, %v669
        %v692 = vpack.c.bf16 %v672, %v670
        %v693 = vpack.c.bf16 %v675, %v673
        %v694 = vpack.c.bf16 %v676, %v674
        %v695 = vpack.c.bf16 %v679, %v677
        %v696 = vpack.c.bf16 %v680, %v678
        %v697 = vld [vmem:[%s392] sm:$0xf]
        %v698 = vld [vmem:[%s392 + $0x4] sm:$0xf]
        %v699 = vld [vmem:[%s392 + $0x8] sm:$0xf]
        %v700 = vld [vmem:[%s392 + $0xc] sm:$0xf]
        %v701 = vld [vmem:[%s392 + $0x10] sm:$0xf]
        %v702 = vld [vmem:[%s392 + $0x14] sm:$0xf]
        %v703 = vld [vmem:[%s392 + $0x18] sm:$0xf]
        %v704 = vld [vmem:[%s392 + $0x1c] sm:$0xf]
        %v705 = vld [vmem:[%s392 + $0x20] sm:$0xf]
        %v706 = vld [vmem:[%s392 + $0x24] sm:$0xf]
        %v707 = vld [vmem:[%s392 + $0x28] sm:$0xf]
        %v708 = vld [vmem:[%s392 + $0x2c] sm:$0xf]
        %v709 = vld [vmem:[%s392 + $0x30] sm:$0xf]
        %v710 = vld [vmem:[%s392 + $0x34] sm:$0xf]
        %v711 = vld [vmem:[%s392 + $0x38] sm:$0xf]
        %v712 = vld [vmem:[%s392 + $0x3c] sm:$0xf]
        %v713 = vld [vmem:[%s392 + $0x40] sm:$0xf]
        %v714 = vld [vmem:[%s392 + $0x44] sm:$0xf]
        %v715 = vld [vmem:[%s392 + $0x48] sm:$0xf]
        %v716 = vld [vmem:[%s392 + $0x4c] sm:$0xf]
        %v717 = vld [vmem:[%s392 + $0x50] sm:$0xf]
        %v718 = vld [vmem:[%s392 + $0x54] sm:$0xf]
        %v719 = vld [vmem:[%s392 + $0x58] sm:$0xf]
        %v720 = vld [vmem:[%s392 + $0x5c] sm:$0xf]
        %v721 = vld [vmem:[%s392 + $0x60] sm:$0xf]
        %v722 = vld [vmem:[%s392 + $0x64] sm:$0xf]
        %v723 = vld [vmem:[%s392 + $0x68] sm:$0xf]
        %v724 = vld [vmem:[%s392 + $0x6c] sm:$0xf]
        %v725 = vld [vmem:[%s392 + $0x70] sm:$0xf]
        %v726 = vld [vmem:[%s392 + $0x74] sm:$0xf]
        %v727 = vld [vmem:[%s392 + $0x78] sm:$0xf]
        %v728 = vld [vmem:[%s392 + $0x7c] sm:$0xf]
        %v761 = vunpack.c.l.b16 %v697
        %v762 = vunpack.c.l.b16 %v698
        %v763 = vunpack.c.l.b16 %v699
        %v764 = vunpack.c.l.b16 %v700
        %v765 = vunpack.c.l.b16 %v701
        %v766 = vunpack.c.l.b16 %v702
        %v767 = vunpack.c.l.b16 %v703
        %v768 = vunpack.c.l.b16 %v704
        %v769 = vunpack.c.l.b16 %v705
        %v770 = vunpack.c.l.b16 %v706
        %v771 = vunpack.c.l.b16 %v707
        %v772 = vunpack.c.l.b16 %v708
        %v773 = vunpack.c.l.b16 %v709
        %v774 = vunpack.c.l.b16 %v710
        %v775 = vunpack.c.l.b16 %v711
        %v776 = vunpack.c.l.b16 %v712
        %v777 = vunpack.c.l.b16 %v713
        %v778 = vunpack.c.l.b16 %v714
        %v779 = vunpack.c.l.b16 %v715
        %v780 = vunpack.c.l.b16 %v716
        %v781 = vunpack.c.l.b16 %v717
        %v782 = vunpack.c.l.b16 %v718
        %v783 = vunpack.c.l.b16 %v719
        %v784 = vunpack.c.l.b16 %v720
        %v785 = vunpack.c.l.b16 %v721
        %v786 = vunpack.c.l.b16 %v722
        %v787 = vunpack.c.l.b16 %v723
        %v788 = vunpack.c.l.b16 %v724
        %v789 = vunpack.c.l.b16 %v725
        %v790 = vunpack.c.l.b16 %v726
        %v791 = vunpack.c.l.b16 %v727
        %v792 = vunpack.c.l.b16 %v728
        %v793 = vpack.c.b16 %v762, %v761
        %v794 = vpack.c.b16 %v764, %v763
        %v795 = vpack.c.b16 %v766, %v765
        %v796 = vpack.c.b16 %v768, %v767
        %v797 = vpack.c.b16 %v770, %v769
        %v798 = vpack.c.b16 %v772, %v771
        %v799 = vpack.c.b16 %v774, %v773
        %v800 = vpack.c.b16 %v776, %v775
        %v801 = vpack.c.b16 %v778, %v777
        %v802 = vpack.c.b16 %v780, %v779
        %v803 = vpack.c.b16 %v782, %v781
        %v804 = vpack.c.b16 %v784, %v783
        %v805 = vpack.c.b16 %v786, %v785
        %v806 = vpack.c.b16 %v788, %v787
        %v807 = vpack.c.b16 %v790, %v789
        %v808 = vpack.c.b16 %v792, %v791
        %825 = vmatprep.subr.bf16.mxu0 0
        %826 = vmatpush1.bf16.msra.mxu0 %v793
        %827 = vmatprep.subr.bf16.mxu0 0
        %828 = vmatpush1.bf16.msra.mxu0 %v794
        %829 = vmatprep.subr.bf16.mxu0 0
        %830 = vmatpush1.bf16.msra.mxu0 %v795
        %831 = vmatprep.subr.bf16.mxu0 0
        %832 = vmatpush1.bf16.msra.mxu0 %v796
        %833 = vmatprep.subr.bf16.mxu0 0
        %834 = vmatpush1.bf16.msra.mxu0 %v797
        %835 = vmatprep.subr.bf16.mxu0 0
        %836 = vmatpush1.bf16.msra.mxu0 %v798
        %837 = vmatprep.subr.bf16.mxu0 0
        %838 = vmatpush1.bf16.msra.mxu0 %v799
        %839 = vmatprep.subr.bf16.mxu0 0
        %840 = vmatpush1.bf16.msra.mxu0 %v800
        %841 = vmatprep.subr.bf16.mxu0 0
        %842 = vmatpush1.bf16.msra.mxu0 %v801
        %843 = vmatprep.subr.bf16.mxu0 0
        %844 = vmatpush1.bf16.msra.mxu0 %v802
        %845 = vmatprep.subr.bf16.mxu0 0
        %846 = vmatpush1.bf16.msra.mxu0 %v803
        %847 = vmatprep.subr.bf16.mxu0 0
        %848 = vmatpush1.bf16.msra.mxu0 %v804
        %849 = vmatprep.subr.bf16.mxu0 0
        %850 = vmatpush1.bf16.msra.mxu0 %v805
        %851 = vmatprep.subr.bf16.mxu0 0
        %852 = vmatpush1.bf16.msra.mxu0 %v806
        %853 = vmatprep.subr.bf16.mxu0 0
        %854 = vmatpush1.bf16.msra.mxu0 %v807
        %855 = vmatprep.subr.bf16.mxu0 0
        %856 = vmatpush1.bf16.msra.mxu0 %v808
        %857 = vmatprep.mubr.bf16.mxu0 %v690
        %858 = vmatmul.mubr.bf16.gmra.mrb[0].mxu0 %v689
        %v859 = vpop.f32.mrb[0].mxu0
        %v860 = vadd.f32 0.0, %v859
        %v861 = vpop.f32.mrb[0].mxu0
        %v862 = vpop.f32.mrb[0].mxu0
        %v863 = vadd.f32 0.0, %v862
        %v864 = vpop.f32.mrb[0].mxu0
        %865 = vmatprep.mubr.bf16.mxu0 %v692
        %866 = vmatmul.mubr.bf16.gmra.mrb[0].mxu0 %v691
        %v867 = vpop.f32.mrb[0].mxu0
        %v868 = vadd.f32 0.0, %v867
        %v869 = vpop.f32.mrb[0].mxu0
        %v870 = vpop.f32.mrb[0].mxu0
        %v871 = vadd.f32 0.0, %v870
        %v872 = vpop.f32.mrb[0].mxu0
        %873 = vmatprep.mubr.bf16.mxu0 %v694
        %874 = vmatmul.mubr.bf16.gmra.mrb[0].mxu0 %v693
        %v875 = vpop.f32.mrb[0].mxu0
        %v876 = vadd.f32 0.0, %v875
        %v877 = vpop.f32.mrb[0].mxu0
        %v878 = vpop.f32.mrb[0].mxu0
        %v879 = vadd.f32 0.0, %v878
        %v880 = vpop.f32.mrb[0].mxu0
        %881 = vmatprep.mubr.bf16.mxu0 %v696
        %882 = vmatmul.mubr.bf16.gmra.mrb[0].mxu0 %v695
        %v883 = vpop.f32.mrb[0].mxu0
        %v884 = vadd.f32 0.0, %v883
        %v885 = vpop.f32.mrb[0].mxu0
        %v886 = vpop.f32.mrb[0].mxu0
        %v887 = vadd.f32 0.0, %v886
        %v888 = vpop.f32.mrb[0].mxu0
        %889 = vdwg.mxu0
        %v890 = vadd.f32 %v681, %v860
        %v891 = vadd.f32 %v682, %v863
        %v892 = vadd.f32 %v683, %v868
        %v893 = vadd.f32 %v684, %v871
        %v894 = vadd.f32 %v685, %v876
        %v895 = vadd.f32 %v686, %v879
        %v896 = vadd.f32 %v687, %v884
        %v897 = vadd.f32 %v688, %v887
        %898 = vst [vmem:[#allocation2] sm:$0xff] %v890
        %899 = vst [vmem:[#allocation2 + $0x8] sm:$0xff] %v891
        %900 = vst [vmem:[#allocation2 + $0x10] sm:$0xff] %v892
        %901 = vst [vmem:[#allocation2 + $0x18] sm:$0xff] %v893
        %902 = vst [vmem:[#allocation2 + $0x20] sm:$0xff] %v894
        %903 = vst [vmem:[#allocation2 + $0x28] sm:$0xff] %v895
        %904 = vst [vmem:[#allocation2 + $0x30] sm:$0xff] %v896
        %905 = vst [vmem:[#allocation2 + $0x38] sm:$0xff] %v897
        %p906 = scmp.eq.s32.totalorder %s24, 1
        // Predicated region
        $region83: #{feed_forward.1} parent=73 // pred_check
          %p907 = pneg %p906
        $region84: #{feed_forward.1} parent=73 // pred_check_branch
          %909 = sbr.rel (%p907) target = $region86
        $region85: #{feed_forward.1} parent=73 // pred_region
          %v910 = vld [vmem:[#allocation2] sm:$0xff]
          %v911 = vld [vmem:[#allocation2 + $0x8] sm:$0xff]
          %v912 = vld [vmem:[#allocation2 + $0x10] sm:$0xff]
          %v913 = vld [vmem:[#allocation2 + $0x18] sm:$0xff]
          %v914 = vld [vmem:[#allocation2 + $0x20] sm:$0xff]
          %v915 = vld [vmem:[#allocation2 + $0x28] sm:$0xff]
          %v916 = vld [vmem:[#allocation2 + $0x30] sm:$0xff]
          %v917 = vld [vmem:[#allocation2 + $0x38] sm:$0xff]
          %v918 = vld [vmem:[%s4] sm:$0x1]
          %v920 = vlaneseq
          %v921 = vshrl.u32 %v920, 7
          %v922 = vsub.s32 0, %v921
          %v923 = vrot.slane %v918, %v922
          %v925 = vadd.f32 %v910, %v923
          %v926 = vadd.f32 %v911, %v923
          %v927 = vadd.f32 %v912, %v923
          %v928 = vadd.f32 %v913, %v923
          %v929 = vadd.f32 %v914, %v923
          %v930 = vadd.f32 %v915, %v923
          %v931 = vadd.f32 %v916, %v923
          %v932 = vadd.f32 %v917, %v923
          %933 = vst [vmem:[%s375] sm:$0xff] %v925
          %934 = vst [vmem:[%s375 + $0x8] sm:$0xff] %v926
          %935 = vst [vmem:[%s375 + $0x10] sm:$0xff] %v927
          %936 = vst [vmem:[%s375 + $0x18] sm:$0xff] %v928
          %937 = vst [vmem:[%s375 + $0x20] sm:$0xff] %v929
          %938 = vst [vmem:[%s375 + $0x28] sm:$0xff] %v930
          %939 = vst [vmem:[%s375 + $0x30] sm:$0xff] %v931
          %940 = vst [vmem:[%s375 + $0x38] sm:$0xff] %v932
        $region86: #{feed_forward.1} parent=73 // pred_fallthru
          _
        %s941 = sand.u32 %s164, 1
        %s942 = scalar_lea.sflag [#allocation5], %s941
        %s943 = sand.u32 %s164, 1
        %s944 = smul.addr %s943, 64
        %s945 = scalar_lea.vmem [#allocation4], %s944
        // Predicated region
        $region87: #{feed_forward.1} parent=73 // pred_check
          %p946 = pneg %p174
        $region88: #{feed_forward.1} parent=73 // pred_check_branch
          %948 = sbr.rel (%p946) target = $region90
        $region89: #{feed_forward.1} parent=73 // pred_region
          %s949 = smul.u32 8, %s23
          %s951 = ssub.s32 1024, 1024
          %952 = vsyncadd %s942, %s951
          %s953 = smul.addr %s949, 128
          %s954 = scalar_lea.hbm %s5, %s953
          %s955 = sshll.u32 %s945, 4
          %s956 = int_to_ptr.vmem [resolvable:$true] %s955
          %961 = dma.vmem_to_hbm [thread:$0]  %s956, 1024, %s954, %s942, 128, 128, 8
        $region90: #{feed_forward.1} parent=73 // pred_fallthru
          _
      $region74: #{feed_forward.1} parent=5 // pred_fallthru
        _
      %p962 = scmp.le.s32.totalorder 2, %s14
      // Predicated region
      $region91: #{feed_forward.1} parent=5 // pred_check
        %p963 = pneg %p962
      $region92: #{feed_forward.1} parent=5 // pred_check_branch
        %965 = sbr.rel (%p963) target = $region94
      $region93: #{feed_forward.1} parent=5 // pred_region
        %s966 = ssub.s32 %s14, 2
        // Predicated region
        $region95: #{feed_forward.1} parent=93 // pred_check
          %p967 = pneg %p180
        $region96: #{feed_forward.1} parent=93 // pred_check_branch
          %969 = sbr.rel (%p967) target = $region98
        $region97: #{feed_forward.1} parent=93 // pred_region
          %s970 = sand.u32 %s165, 1
          %s971 = scalar_lea.sflag [#allocation5], %s970
          %s972 = sand.u32 %s165, 1
          %s973 = smul.addr %s972, 64
          %s974 = scalar_lea.vmem [#allocation4], %s973
          %975 = dma.done %s971, 1024
        $region98: #{feed_forward.1} parent=93 // pred_fallthru
          _
      $region94: #{feed_forward.1} parent=5 // pred_fallthru
        _
    $region6: #{feed_forward.1} parent=1 // loop_footer
      %s18 = sadd.s32 1, %s14
    $region7: #{feed_forward.1} parent=1 // loop_footer_branch
      %13 = sbr.rel target = $region3
    $region8: #{feed_forward.1} parent=1 // loop_exit
      _
    %976 = vsyncpa [#allocation5], 1
    %s977 = scalar_lea.sflag [#allocation5], 1
    %978 = vsyncpa %s977, 1

</llo_original>
